<compile_context>
chip_gen: v7x
topology: tpu7x:2x2x1
jax: 0.10.0
libtpu: 0.0.40
codegen_flags: <defaults>
</compile_context>

<pallas_src>
import math

import jax
import jax.numpy as jnp
import numpy as np
from jax import lax
from jax.experimental import pallas as pl
from jax.experimental.pallas import tpu as pltpu


def enc_dec_kernel(t_ref, x_ref, qtab_ref, wvo_ref, out_ref):
    """Single grid step: both batch elements, folded-weight cross-attention.

    t_ref   : [B, T, 1] int32 token ids (VMEM)
    x_ref   : [B, C, S] f32   flattened image, lane-dense (S on the lane axis)
    qtab_ref: [V, C]    f32   = Emb @ Wq @ Wk^T @ We^T / sqrt(D)
    wvo_ref : [C, V]    f32   = We @ Wv @ Wo @ Wout
    out_ref : [B, T, V] f32   logits
    """
    B, T, V = out_ref.shape

    # One-hot gather replacement: VPU compare + tiny MXU matmul.
    # OOB token ids just produce a zero row (no unchecked VMEM reads).
    tok = t_ref[...]                                                  # [B, T, 1]
    iota_v = lax.broadcasted_iota(jnp.int32, (B, T, V), 2)            # [B, T, V]
    onehot = (tok == iota_v).astype(jnp.float32)                      # [B, T, V]

    q_table = qtab_ref[...]                                           # [V, C]
    w_vo = wvo_ref[...]                                               # [C, V]

    for b in range(B):  # B=2, static unrolled
        x = x_ref[b]                                                  # [C, S]

        # q = temb @ Wq @ Wk^T @ We^T / sqrt(D)  (fully folded, exact)
        q = jnp.dot(onehot[b], q_table,
                    preferred_element_type=jnp.float32)               # [T, C]

        # scores = q @ x  (== q @ k^T with the encoder folded in)
        scores = jnp.dot(q, x, preferred_element_type=jnp.float32)    # [T, S]

        # numerically stable softmax over the context axis (f32 VPU/EUP)
        m = jnp.max(scores, axis=-1, keepdims=True)
        p = jnp.exp(scores - m)
        denom = jnp.sum(p, axis=-1, keepdims=True)
        attn = p * pl.reciprocal(denom, approx=True)                  # [T, S]

        # logits = (attn @ x^T) @ w_vo  (== attn @ V @ Wo @ Wout folded)
        ax = lax.dot_general(
            attn, x,
            dimension_numbers=(((1,), (1,)), ((), ())),  # contract S; no .T
            preferred_element_type=jnp.float32)                       # [T, C]
        out_ref[b] = jnp.dot(ax, w_vo,
                             preferred_element_type=jnp.float32)      # [T, V]


def prepare_params(params):
    """One-time host-side weight folding (exact; no nonlinearity crossed).

    Hoisted out of the per-call path: the pallas_call itself is ~1 us of work,
    so re-dispatching these small matmuls per forward call would dominate.
    """
    D = params["we"].shape[1]
    w_qk = (params["wq"] @ params["wk"].T @ params["we"].T) / math.sqrt(D)  # [D, C]
    q_table = (params["emb"] @ w_qk).astype(jnp.float32)                    # [V, C]
    w_vo = (params["we"] @ params["wv"] @ params["wo"]
            @ params["wout"]).astype(jnp.float32)                           # [C, V]
    return {"q_table": q_table, "w_vo": w_vo}


@jax.jit
def model_forward(x, t, folded):
    """Pallas equivalent of Model.forward(x, t) given pre-folded weights."""
    B, C, H, W = x.shape
    S = H * W
    T = t.shape[1]
    V, _ = folded["q_table"].shape

    # NCHW -> [B, C, S]: contiguous (free) reshape; S lands on the lane axis.
    x_bcs = x.reshape(B, C, S).astype(jnp.float32)
    # Token ids as [B, T, 1] so the in-kernel broadcast against the V-iota
    # needs no relayout.
    t_in = t.reshape(B, T, 1).astype(jnp.int32)

    grid_spec = pl.GridSpec(
        grid=(1,),  # single step: everything (<50 KiB) is VMEM resident
        in_specs=[
            pl.BlockSpec((B, T, 1), lambda i: (0, 0, 0)),   # token ids
            pl.BlockSpec((B, C, S), lambda i: (0, 0, 0)),   # x, lane-dense
            pl.BlockSpec((V, C),    lambda i: (0, 0)),      # folded emb/QK table
            pl.BlockSpec((C, V),    lambda i: (0, 0)),      # folded V/O/out proj
        ],
        out_specs=pl.BlockSpec((B, T, V), lambda i: (0, 0, 0)),
    )

    return pl.pallas_call(
        enc_dec_kernel,
        out_shape=jax.ShapeDtypeStruct((B, T, V), jnp.float32),
        grid_spec=grid_spec,
        compiler_params=pltpu.CompilerParams(
            dimension_semantics=("arbitrary",)),
    )(t_in, x_bcs, folded["q_table"], folded["w_vo"])


def reference_forward(x, t, params):
    """Pure-JAX f32 reference (unfolded), for correctness checking."""
    B, C, H, W = x.shape
    x_flat = jnp.transpose(x, (0, 2, 3, 1)).reshape(B, H * W, C)
    ctx = x_flat @ params["we"]
    temb = params["emb"][t]
    q = temb @ params["wq"]
    k = ctx @ params["wk"]
    v = ctx @ params["wv"]
    d = q.shape[-1]
    scores = jnp.einsum("btd,bsd->bts", q, k) / math.sqrt(d)
    attn = jax.nn.softmax(scores, axis=-1)
    o = jnp.einsum("bts,bsd->btd", attn, v) @ params["wo"]
    return o @ params["wout"]


def init_params(key, C, D, V):
    ks = jax.random.split(key, 7)
    return {
        "emb":  jax.random.normal(ks[0], (V, D), jnp.float32),
        "we":   jax.random.normal(ks[1], (C, D), jnp.float32) / math.sqrt(C),
        "wq":   jax.random.normal(ks[2], (D, D), jnp.float32) / math.sqrt(D),
        "wk":   jax.random.normal(ks[3], (D, D), jnp.float32) / math.sqrt(D),
        "wv":   jax.random.normal(ks[4], (D, D), jnp.float32) / math.sqrt(D),
        "wo":   jax.random.normal(ks[5], (D, D), jnp.float32) / math.sqrt(D),
        "wout": jax.random.normal(ks[6], (D, V), jnp.float32) / math.sqrt(D),
    }


if __name__ == "__main__":
    B, C, H, W = 2, 4, 16, 16   # image input x (NCHW)
    T, D, V = 8, 32, 64         # decoder tokens, hidden dim, vocab size

    key = jax.random.PRNGKey(0)
    kx, kt, kp = jax.random.split(key, 3)

    x = jax.random.normal(kx, (B, C, H, W), jnp.float32)
    t = jax.random.randint(kt, (B, T), 0, V, dtype=jnp.int32)
    params = init_params(kp, C, D, V)

    folded = prepare_params(params)            # one-time weight folding
    folded = jax.tree_util.tree_map(jax.block_until_ready, folded)

    out = model_forward(x, t, folded)
    out = jax.block_until_ready(out)

    ref = reference_forward(x, t, params)
    # f32 in-kernel math; only approx-reciprocal softmax normalization differs.
    np.testing.assert_allclose(np.asarray(out), np.asarray(ref),
                               rtol=1e-2, atol=1e-2)

    print("KERNEL_OK")
</pallas_src>

<mosaic_0001>
module attributes {stable_mosaic.version = 11 : i64} {
  func.func @enc_dec_kernel(%arg0: i32, %arg1: memref<2x8x1xi32, #tpu.memory_space<vmem>>, %arg2: memref<2x4x256xf32, #tpu.memory_space<vmem>>, %arg3: memref<64x4xf32, #tpu.memory_space<vmem>>, %arg4: memref<4x64xf32, #tpu.memory_space<vmem>>, %arg5: memref<2x8x64xf32, #tpu.memory_space<vmem>>) attributes {dimension_semantics = [#tpu.dimension_semantics<arbitrary>], iteration_bounds = array<i64: 1>, scalar_prefetch = 0 : i64, scratch_operands = 0 : i64, tpu.core_type = #tpu.core_type<tc>, window_params = [{pipeline_mode = #tpu.pipeline_mode<synchronous>, transform_indices = @transform_0, window_bounds = array<i64: 2, 8, 1>}, {pipeline_mode = #tpu.pipeline_mode<synchronous>, transform_indices = @transform_1, window_bounds = array<i64: 2, 4, 256>}, {pipeline_mode = #tpu.pipeline_mode<synchronous>, transform_indices = @transform_2, window_bounds = array<i64: 64, 4>}, {pipeline_mode = #tpu.pipeline_mode<synchronous>, transform_indices = @transform_3, window_bounds = array<i64: 4, 64>}, {pipeline_mode = #tpu.pipeline_mode<synchronous>, transform_indices = @transform_4, window_bounds = array<i64: 2, 8, 64>}]} {
    %c0 = arith.constant 0 : index
    %c0_0 = arith.constant 0 : index
    %c0_1 = arith.constant 0 : index
    %0 = vector.load %arg1[%c0, %c0_0, %c0_1] : memref<2x8x1xi32, #tpu.memory_space<vmem>>, vector<2x8x1xi32>
    %1 = tpu.iota {dimensions = array<i32: 2>} : vector<2x8x64xi32>
    %2 = vector.broadcast %0 : vector<2x8x1xi32> to vector<2x8x64xi32>
    %3 = arith.cmpi eq, %2, %1 : vector<2x8x64xi32>
    %4 = arith.extui %3 : vector<2x8x64xi1> to vector<2x8x64xi32>
    %5 = arith.sitofp %4 : vector<2x8x64xi32> to vector<2x8x64xf32>
    %c0_2 = arith.constant 0 : index
    %c0_3 = arith.constant 0 : index
    %6 = vector.load %arg3[%c0_2, %c0_3] : memref<64x4xf32, #tpu.memory_space<vmem>>, vector<64x4xf32>
    %c0_4 = arith.constant 0 : index
    %c0_5 = arith.constant 0 : index
    %7 = vector.load %arg4[%c0_4, %c0_5] : memref<4x64xf32, #tpu.memory_space<vmem>>, vector<4x64xf32>
    %c0_6 = arith.constant 0 : index
    %c0_7 = arith.constant 0 : index
    %c0_8 = arith.constant 0 : index
    %8 = vector.load %arg2[%c0_6, %c0_7, %c0_8] : memref<2x4x256xf32, #tpu.memory_space<vmem>>, vector<1x4x256xf32>
    %9 = vector.shape_cast %8 : vector<1x4x256xf32> to vector<4x256xf32>
    %10 = vector.extract_strided_slice %5 {offsets = [0, 0, 0], sizes = [1, 8, 64], strides = [1, 1, 1]} : vector<2x8x64xf32> to vector<1x8x64xf32>
    %11 = vector.shape_cast %10 : vector<1x8x64xf32> to vector<8x64xf32>
    %cst = arith.constant dense<0.000000e+00> : vector<8x4xf32>
    %12 = tpu.matmul %11, %6, %cst {dimension_numbers = #tpu.dot_dimension_numbers<[1], [0], [0], [1], [0, 0, 1, 1], [], []>} : vector<8x64xf32>, vector<64x4xf32>, vector<8x4xf32> -> vector<8x4xf32>
    %cst_9 = arith.constant dense<0.000000e+00> : vector<8x256xf32>
    %13 = tpu.matmul %12, %9, %cst_9 {dimension_numbers = #tpu.dot_dimension_numbers<[1], [0], [0], [1], [0, 0, 1, 1], [], []>} : vector<8x4xf32>, vector<4x256xf32>, vector<8x256xf32> -> vector<8x256xf32>
    %cst_10 = arith.constant dense<0xFF800000> : vector<8xf32>
    %14 = vector.multi_reduction <maximumf>, %13, %cst_10 [1] : vector<8x256xf32> to vector<8xf32>
    %15 = vector.shape_cast %14 : vector<8xf32> to vector<8x1xf32>
    %16 = vector.broadcast %15 : vector<8x1xf32> to vector<8x256xf32>
    %17 = arith.subf %13, %16 : vector<8x256xf32>
    %18 = math.exp %17 : vector<8x256xf32>
    %cst_11 = arith.constant dense<0.000000e+00> : vector<8xf32>
    %19 = vector.multi_reduction <add>, %18, %cst_11 [1] : vector<8x256xf32> to vector<8xf32>
    %20 = vector.shape_cast %19 : vector<8xf32> to vector<8x1xf32>
    %21 = tpu.reciprocal %20 {approx = true} : vector<8x1xf32> -> vector<8x1xf32>
    %22 = vector.broadcast %21 : vector<8x1xf32> to vector<8x256xf32>
    %23 = arith.mulf %18, %22 : vector<8x256xf32>
    %cst_12 = arith.constant dense<0.000000e+00> : vector<8x4xf32>
    %24 = tpu.matmul %23, %9, %cst_12 {dimension_numbers = #tpu.dot_dimension_numbers<[1], [1], [0], [0], [0, 0, 1, 0], [], []>} : vector<8x256xf32>, vector<4x256xf32>, vector<8x4xf32> -> vector<8x4xf32>
    %cst_13 = arith.constant dense<0.000000e+00> : vector<8x64xf32>
    %25 = tpu.matmul %24, %7, %cst_13 {dimension_numbers = #tpu.dot_dimension_numbers<[1], [0], [0], [1], [0, 0, 1, 1], [], []>} : vector<8x4xf32>, vector<4x64xf32>, vector<8x64xf32> -> vector<8x64xf32>
    %c0_14 = arith.constant 0 : index
    %c0_15 = arith.constant 0 : index
    %c0_16 = arith.constant 0 : index
    %26 = vector.load %arg5[%c0_14, %c0_15, %c0_16] : memref<2x8x64xf32, #tpu.memory_space<vmem>>, vector<1x8x64xf32>
    %27 = vector.shape_cast %26 : vector<1x8x64xf32> to vector<8x64xf32>
    %28 = vector.shape_cast %25 : vector<8x64xf32> to vector<1x8x64xf32>
    tpu.vector_store %arg5[%c0_14, %c0_15, %c0_16], %28 {strides = array<i32>} : memref<2x8x64xf32, #tpu.memory_space<vmem>>, vector<1x8x64xf32>,
    %c1 = arith.constant 1 : index
    %c0_17 = arith.constant 0 : index
    %c0_18 = arith.constant 0 : index
    %29 = vector.load %arg2[%c1, %c0_17, %c0_18] : memref<2x4x256xf32, #tpu.memory_space<vmem>>, vector<1x4x256xf32>
    %30 = vector.shape_cast %29 : vector<1x4x256xf32> to vector<4x256xf32>
    %31 = vector.extract_strided_slice %5 {offsets = [1, 0, 0], sizes = [1, 8, 64], strides = [1, 1, 1]} : vector<2x8x64xf32> to vector<1x8x64xf32>
    %32 = vector.shape_cast %31 : vector<1x8x64xf32> to vector<8x64xf32>
    %cst_19 = arith.constant dense<0.000000e+00> : vector<8x4xf32>
    %33 = tpu.matmul %32, %6, %cst_19 {dimension_numbers = #tpu.dot_dimension_numbers<[1], [0], [0], [1], [0, 0, 1, 1], [], []>} : vector<8x64xf32>, vector<64x4xf32>, vector<8x4xf32> -> vector<8x4xf32>
    %cst_20 = arith.constant dense<0.000000e+00> : vector<8x256xf32>
    %34 = tpu.matmul %33, %30, %cst_20 {dimension_numbers = #tpu.dot_dimension_numbers<[1], [0], [0], [1], [0, 0, 1, 1], [], []>} : vector<8x4xf32>, vector<4x256xf32>, vector<8x256xf32> -> vector<8x256xf32>
    %cst_21 = arith.constant dense<0xFF800000> : vector<8xf32>
    %35 = vector.multi_reduction <maximumf>, %34, %cst_21 [1] : vector<8x256xf32> to vector<8xf32>
    %36 = vector.shape_cast %35 : vector<8xf32> to vector<8x1xf32>
    %37 = vector.broadcast %36 : vector<8x1xf32> to vector<8x256xf32>
    %38 = arith.subf %34, %37 : vector<8x256xf32>
    %39 = math.exp %38 : vector<8x256xf32>
    %cst_22 = arith.constant dense<0.000000e+00> : vector<8xf32>
    %40 = vector.multi_reduction <add>, %39, %cst_22 [1] : vector<8x256xf32> to vector<8xf32>
    %41 = vector.shape_cast %40 : vector<8xf32> to vector<8x1xf32>
    %42 = tpu.reciprocal %41 {approx = true} : vector<8x1xf32> -> vector<8x1xf32>
    %43 = vector.broadcast %42 : vector<8x1xf32> to vector<8x256xf32>
    %44 = arith.mulf %39, %43 : vector<8x256xf32>
    %cst_23 = arith.constant dense<0.000000e+00> : vector<8x4xf32>
    %45 = tpu.matmul %44, %30, %cst_23 {dimension_numbers = #tpu.dot_dimension_numbers<[1], [1], [0], [0], [0, 0, 1, 0], [], []>} : vector<8x256xf32>, vector<4x256xf32>, vector<8x4xf32> -> vector<8x4xf32>
    %cst_24 = arith.constant dense<0.000000e+00> : vector<8x64xf32>
    %46 = tpu.matmul %45, %7, %cst_24 {dimension_numbers = #tpu.dot_dimension_numbers<[1], [0], [0], [1], [0, 0, 1, 1], [], []>} : vector<8x4xf32>, vector<4x64xf32>, vector<8x64xf32> -> vector<8x64xf32>
    %c1_25 = arith.constant 1 : index
    %c0_26 = arith.constant 0 : index
    %c0_27 = arith.constant 0 : index
    %47 = vector.load %arg5[%c1_25, %c0_26, %c0_27] : memref<2x8x64xf32, #tpu.memory_space<vmem>>, vector<1x8x64xf32>
    %48 = vector.shape_cast %47 : vector<1x8x64xf32> to vector<8x64xf32>
    %49 = vector.shape_cast %46 : vector<8x64xf32> to vector<1x8x64xf32>
    tpu.vector_store %arg5[%c1_25, %c0_26, %c0_27], %49 {strides = array<i32>} : memref<2x8x64xf32, #tpu.memory_space<vmem>>, vector<1x8x64xf32>,
    return
  }
  func.func @transform_0(%arg0: i32) -> (i32, i32, i32) {
    %c0_i32 = arith.constant 0 : i32
    %c0_i32_0 = arith.constant 0 : i32
    %c0_i32_1 = arith.constant 0 : i32
    %c0_i32_2 = arith.constant 0 : i32
    return %c0_i32, %c0_i32_0, %c0_i32_1 : i32, i32, i32
  }
  func.func @transform_1(%arg0: i32) -> (i32, i32, i32) {
    %c0_i32 = arith.constant 0 : i32
    %c0_i32_0 = arith.constant 0 : i32
    %c0_i32_1 = arith.constant 0 : i32
    %c0_i32_2 = arith.constant 0 : i32
    return %c0_i32, %c0_i32_0, %c0_i32_1 : i32, i32, i32
  }
  func.func @transform_2(%arg0: i32) -> (i32, i32) {
    %c0_i32 = arith.constant 0 : i32
    %c0_i32_0 = arith.constant 0 : i32
    %c0_i32_1 = arith.constant 0 : i32
    return %c0_i32, %c0_i32_0 : i32, i32
  }
  func.func @transform_3(%arg0: i32) -> (i32, i32) {
    %c0_i32 = arith.constant 0 : i32
    %c0_i32_0 = arith.constant 0 : i32
    %c0_i32_1 = arith.constant 0 : i32
    return %c0_i32, %c0_i32_0 : i32, i32
  }
  func.func @transform_4(%arg0: i32) -> (i32, i32, i32) {
    %c0_i32 = arith.constant 0 : i32
    %c0_i32_0 = arith.constant 0 : i32
    %c0_i32_1 = arith.constant 0 : i32
    %c0_i32_2 = arith.constant 0 : i32
    return %c0_i32, %c0_i32_0, %c0_i32_1 : i32, i32, i32
  }
}

</mosaic_0001>

<llo_original>
// kernel: model_forward.1
$region0: #{model_forward.1}
  #allocation0 [shape = 'u32[]', space=smem, size = 0x4, offset = 0x4, fixed_abs, tag = 'smem constant byte address 0x4 - core index']
  #allocation1 [shape = 'u32[144,128]{1,0:T(1,128)}', space=vmem, size = 0x12000, scoped, tag = 'internal scratch']
  %s0 = inlined_call_operand.vmem [shape: s32[2,8,1], index: 0, kind: input, shape index: {}]
  %s1 = inlined_call_operand.vmem [shape: f32[2,4,256], index: 1, kind: input, shape index: {}]
  %s2 = inlined_call_operand.vmem [shape: f32[64,4], index: 2, kind: input, shape index: {}]
  %s3 = inlined_call_operand.vmem [shape: f32[4,64], index: 3, kind: input, shape index: {}]
  %s4 = inlined_call_operand.hbm [shape: f32[2,8,64], index: 4, kind: output, shape index: {}]
  %s5 = sld [smem:[#allocation0]]
  $region26: #{model_forward.1} parent=0
    _
  %s7 = ssub.s32 1, %s5
  %s8 = scalar_select 0, %s7, %s5
  $region1: #{model_forward.1} parent=0
    #allocation2 [shape = 'u8[8192]{0}', space=vmem, size = 0x2000, scoped, tag = 'output window, operand 0, single buffered']
    #allocation3 [shape = 's32[1]{0}', space=sflag, size = 0x4, scoped, tag = 'scoped memory for model_forward.1']
    %9 = vsyncpa [#allocation3], 0
    // Predicated region
    $region2: #{model_forward.1} parent=1 // pred_check
      _
    $region3: #{model_forward.1} parent=1 // pred_check_branch
      %11 = sbr.rel (0) target = $region5
    $region4: #{model_forward.1} parent=1 // pred_region
      _
    $region5: #{model_forward.1} parent=1 // pred_fallthru
      _
    // Predicated region
    $region6: #{model_forward.1} parent=1 // pred_check
      _
    $region7: #{model_forward.1} parent=1 // pred_check_branch
      %13 = sbr.rel (0) target = $region9
    $region8: #{model_forward.1} parent=1 // pred_region
      _
    $region9: #{model_forward.1} parent=1 // pred_fallthru
      _
    // Predicated region
    $region10: #{model_forward.1} parent=1 // pred_check
      _
    $region11: #{model_forward.1} parent=1 // pred_check_branch
      %15 = sbr.rel (0) target = $region13
    $region12: #{model_forward.1} parent=1 // pred_region
      _
    $region13: #{model_forward.1} parent=1 // pred_fallthru
      _
    // Predicated region
    $region14: #{model_forward.1} parent=1 // pred_check
      _
    $region15: #{model_forward.1} parent=1 // pred_check_branch
      %17 = sbr.rel (0) target = $region17
    $region16: #{model_forward.1} parent=1 // pred_region
      _
    $region17: #{model_forward.1} parent=1 // pred_fallthru
      _
    %v18 = vld [vmem:[%s0] sm:$0xff]
    %v19 = vld [vmem:[%s0 + $0x8] sm:$0xff]
    %v20 = vlaneseq
    %v21 = vand.u32 %v20, 127
    %22 = vset.pattern.permute.xlu0 0
    %23 = vperm.xlu0 %22, %v18
    %v24 = vpop.permute.xlu0 %23
    %25 = vset.pattern.permute.xlu0 0
    %26 = vperm.xlu0 %25, %v19
    %v27 = vpop.permute.xlu0 %26
    %vm28 = vcmp.eq.s32.totalorder %v24, %v21
    %vm29 = vcmp.eq.s32.totalorder %v27, %v21
    %v30 = vsel %vm28, 1, 0
    %v31 = vsel %vm29, 1, 0
    %v32 = vcvt.s32.f32 %v30
    %v33 = vcvt.s32.f32 %v31
    %v34 = vld [vmem:[%s2] sm:$0xff]
    %v35 = vld [vmem:[%s2 + $0x8] sm:$0xff]
    %v36 = vld [vmem:[%s2 + $0x10] sm:$0xff]
    %v37 = vld [vmem:[%s2 + $0x18] sm:$0xff]
    %v38 = vld [vmem:[%s2 + $0x20] sm:$0xff]
    %v39 = vld [vmem:[%s2 + $0x28] sm:$0xff]
    %v40 = vld [vmem:[%s2 + $0x30] sm:$0xff]
    %v41 = vld [vmem:[%s2 + $0x38] sm:$0xff]
    %v42 = vld [vmem:[%s3] sm:$0xf]
    %v43 = vld [vmem:[%s1] sm:$0xff]
    %vm44 = vcmask 523264
    %v46 = vsel %vm44, %v32, 0
    %48 = vmatprep.subr.mxu0 0.0
    %49 = vmatpush1.msra.mxu0 %v34
    %50 = vmatprep.subr.mxu0 0.0
    %51 = vmatpush1.msra.mxu0 %v35
    %52 = vmatprep.subr.mxu0 0.0
    %53 = vmatpush1.msra.mxu0 %v36
    %54 = vmatprep.subr.mxu0 0.0
    %55 = vmatpush1.msra.mxu0 %v37
    %56 = vmatprep.subr.mxu0 0.0
    %57 = vmatpush1.msra.mxu0 %v38
    %58 = vmatprep.subr.mxu0 0.0
    %59 = vmatpush1.msra.mxu0 %v39
    %60 = vmatprep.subr.mxu0 0.0
    %61 = vmatpush1.msra.mxu0 %v40
    %62 = vmatprep.subr.mxu0 0.0
    %63 = vmatpush1.msra.mxu0 %v41
    %64 = vmatprep.subr.mxu0 0.0
    %65 = vmatpush1.msra.mxu0 0.0
    %66 = vmatprep.subr.mxu0 0.0
    %67 = vmatpush1.msra.mxu0 0.0
    %68 = vmatprep.subr.mxu0 0.0
    %69 = vmatpush1.msra.mxu0 0.0
    %70 = vmatprep.subr.mxu0 0.0
    %71 = vmatpush1.msra.mxu0 0.0
    %72 = vmatprep.subr.mxu0 0.0
    %73 = vmatpush1.msra.mxu0 0.0
    %74 = vmatprep.subr.mxu0 0.0
    %75 = vmatpush1.msra.mxu0 0.0
    %76 = vmatprep.subr.mxu0 0.0
    %77 = vmatpush1.msra.mxu0 0.0
    %78 = vmatprep.subr.mxu0 0.0
    %79 = vmatpush1.msra.mxu0 0.0
    %80 = vmatprep.subr.mxu0 0.0
    %81 = vmatpush1.msra.mxu0 0.0
    %82 = vmatprep.subr.mxu0 0.0
    %83 = vmatpush1.msra.mxu0 0.0
    %84 = vmatprep.subr.mxu0 0.0
    %85 = vmatpush1.msra.mxu0 0.0
    %86 = vmatprep.subr.mxu0 0.0
    %87 = vmatpush1.msra.mxu0 0.0
    %88 = vmatprep.subr.mxu0 0.0
    %89 = vmatpush1.msra.mxu0 0.0
    %90 = vmatprep.subr.mxu0 0.0
    %91 = vmatpush1.msra.mxu0 0.0
    %92 = vmatprep.subr.mxu0 0.0
    %93 = vmatpush1.msra.mxu0 0.0
    %94 = vmatprep.subr.mxu0 0.0
    %95 = vmatpush1.msra.mxu0 0.0
    %96 = vmatprep.subr.mxu0 0.0
    %97 = vmatpush1.msra.mxu0 0.0
    %98 = vmatprep.subr.mxu0 0.0
    %99 = vmatpush1.msra.mxu0 0.0
    %100 = vmatprep.subr.mxu0 0.0
    %101 = vmatpush1.msra.mxu0 0.0
    %102 = vmatprep.subr.mxu0 0.0
    %103 = vmatpush1.msra.mxu0 0.0
    %104 = vmatprep.subr.mxu0 0.0
    %105 = vmatpush1.msra.mxu0 0.0
    %106 = vmatprep.subr.mxu0 0.0
    %107 = vmatpush1.msra.mxu0 0.0
    %108 = vmatprep.subr.mxu0 0.0
    %109 = vmatpush1.msra.mxu0 0.0
    %110 = vmatprep.subr.mxu0 0.0
    %111 = vmatpush1.msra.mxu0 0.0
    %112 = vmatprep.mubr.f32.mxu0 0.0
    %113 = vmatmul.mubr.f32.gmra.mrb[0].mxu0 %v46
    %v114 = vpop.f32.mrb[0].mxu0
    %v115 = vadd.f32 0.0, %v114
    %v116 = vpop.f32.mrb[0].mxu0
    %117 = vdwg.mxu0
    %v119 = vcombine.high %v43, %v43
    %vm120 = vcmask 31744
    %v122 = vsel %vm120, %v115, 0
    %vm124 = vcmask 1043456
    %v125 = vsel %vm124, %v43, 0
    %v127 = vsel %vm124, %v119, 0
    %129 = vmatprep.subr.mxu0 %v127
    %130 = vmatpush1.msra.mxu0 %v125
    %131 = vmatprep.subr.mxu0 0.0
    %132 = vmatpush1.msra.mxu0 0.0
    %133 = vmatprep.subr.mxu0 0.0
    %134 = vmatpush1.msra.mxu0 0.0
    %135 = vmatprep.subr.mxu0 0.0
    %136 = vmatpush1.msra.mxu0 0.0
    %137 = vmatprep.subr.mxu0 0.0
    %138 = vmatpush1.msra.mxu0 0.0
    %139 = vmatprep.subr.mxu0 0.0
    %140 = vmatpush1.msra.mxu0 0.0
    %141 = vmatprep.subr.mxu0 0.0
    %142 = vmatpush1.msra.mxu0 0.0
    %143 = vmatprep.subr.mxu0 0.0
    %144 = vmatpush1.msra.mxu0 0.0
    %145 = vmatprep.subr.mxu0 0.0
    %146 = vmatpush1.msra.mxu0 0.0
    %147 = vmatprep.subr.mxu0 0.0
    %148 = vmatpush1.msra.mxu0 0.0
    %149 = vmatprep.subr.mxu0 0.0
    %150 = vmatpush1.msra.mxu0 0.0
    %151 = vmatprep.subr.mxu0 0.0
    %152 = vmatpush1.msra.mxu0 0.0
    %153 = vmatprep.subr.mxu0 0.0
    %154 = vmatpush1.msra.mxu0 0.0
    %155 = vmatprep.subr.mxu0 0.0
    %156 = vmatpush1.msra.mxu0 0.0
    %157 = vmatprep.subr.mxu0 0.0
    %158 = vmatpush1.msra.mxu0 0.0
    %159 = vmatprep.subr.mxu0 0.0
    %160 = vmatpush1.msra.mxu0 0.0
    %161 = vmatprep.subr.mxu0 0.0
    %162 = vmatpush1.msra.mxu0 0.0
    %163 = vmatprep.subr.mxu0 0.0
    %164 = vmatpush1.msra.mxu0 0.0
    %165 = vmatprep.subr.mxu0 0.0
    %166 = vmatpush1.msra.mxu0 0.0
    %167 = vmatprep.subr.mxu0 0.0
    %168 = vmatpush1.msra.mxu0 0.0
    %169 = vmatprep.subr.mxu0 0.0
    %170 = vmatpush1.msra.mxu0 0.0
    %171 = vmatprep.subr.mxu0 0.0
    %172 = vmatpush1.msra.mxu0 0.0
    %173 = vmatprep.subr.mxu0 0.0
    %174 = vmatpush1.msra.mxu0 0.0
    %175 = vmatprep.subr.mxu0 0.0
    %176 = vmatpush1.msra.mxu0 0.0
    %177 = vmatprep.subr.mxu0 0.0
    %178 = vmatpush1.msra.mxu0 0.0
    %179 = vmatprep.subr.mxu0 0.0
    %180 = vmatpush1.msra.mxu0 0.0
    %181 = vmatprep.subr.mxu0 0.0
    %182 = vmatpush1.msra.mxu0 0.0
    %183 = vmatprep.subr.mxu0 0.0
    %184 = vmatpush1.msra.mxu0 0.0
    %185 = vmatprep.subr.mxu0 0.0
    %186 = vmatpush1.msra.mxu0 0.0
    %187 = vmatprep.subr.mxu0 0.0
    %188 = vmatpush1.msra.mxu0 0.0
    %189 = vmatprep.subr.mxu0 0.0
    %190 = vmatpush1.msra.mxu0 0.0
    %191 = vmatprep.subr.mxu0 0.0
    %192 = vmatpush1.msra.mxu0 0.0
    %193 = vmatprep.mubr.f32.mxu0 0.0
    %194 = vmatmul.mubr.f32.gmra.mrb[0].mxu0 %v122
    %v195 = vpop.f32.mrb[0].mxu0
    %v196 = vadd.f32 0.0, %v195
    %v197 = vpop.f32.mrb[0].mxu0
    %v198 = vadd.f32 0.0, %v197
    %199 = vdwg.mxu0
    %v200 = vmax.f32 %v196, %v198
    %201 = vmax.xlane.f32.xlu0 %v200
    %v202 = vpop.xlane.xlu0 %201
    %v203 = vsub.f32 %v196, %v202
    %v204 = vsub.f32 %v198, %v202
    %v205 = vmul.f32 %v203, 1.442695
    %v206 = vpow.pop %v205
    %v207 = vmul.f32 %v204, 1.442695
    %v208 = vpow.pop %v207
    %v209 = vadd.f32 %v206, %v208
    %210 = vadd.xlane.f32.xlu0 %v209
    %v211 = vpop.xlane.xlu0 %210
    %v212 = vrcp.pop %v211
    %v213 = vmul.f32 %v206, %v212
    %v214 = vmul.f32 %v208, %v212
    %216 = vmatprep.subr.mxu0 %v119
    %217 = vmatpush1.xpose.msra.mxu0 %v43
    %218 = vmatprep.subr.mxu0 0.0
    %219 = vmatpush1.xpose.msra.mxu0 0.0
    %220 = vmatprep.subr.mxu0 0.0
    %221 = vmatpush1.xpose.msra.mxu0 0.0
    %222 = vmatprep.subr.mxu0 0.0
    %223 = vmatpush1.xpose.msra.mxu0 0.0
    %224 = vmatprep.subr.mxu0 0.0
    %225 = vmatpush1.xpose.msra.mxu0 0.0
    %226 = vmatprep.subr.mxu0 0.0
    %227 = vmatpush1.xpose.msra.mxu0 0.0
    %228 = vmatprep.subr.mxu0 0.0
    %229 = vmatpush1.xpose.msra.mxu0 0.0
    %230 = vmatprep.subr.mxu0 0.0
    %231 = vmatpush1.xpose.msra.mxu0 0.0
    %232 = vmatprep.subr.mxu0 0.0
    %233 = vmatpush1.xpose.msra.mxu0 0.0
    %234 = vmatprep.subr.mxu0 0.0
    %235 = vmatpush1.xpose.msra.mxu0 0.0
    %236 = vmatprep.subr.mxu0 0.0
    %237 = vmatpush1.xpose.msra.mxu0 0.0
    %238 = vmatprep.subr.mxu0 0.0
    %239 = vmatpush1.xpose.msra.mxu0 0.0
    %240 = vmatprep.subr.mxu0 0.0
    %241 = vmatpush1.xpose.msra.mxu0 0.0
    %242 = vmatprep.subr.mxu0 0.0
    %243 = vmatpush1.xpose.msra.mxu0 0.0
    %244 = vmatprep.subr.mxu0 0.0
    %245 = vmatpush1.xpose.msra.mxu0 0.0
    %246 = vmatprep.subr.mxu0 0.0
    %247 = vmatpush1.xpose.msra.mxu0 0.0
    %248 = vmatprep.subr.mxu0 0.0
    %249 = vmatpush1.xpose.msra.mxu0 0.0
    %250 = vmatprep.subr.mxu0 0.0
    %251 = vmatpush1.xpose.msra.mxu0 0.0
    %252 = vmatprep.subr.mxu0 0.0
    %253 = vmatpush1.xpose.msra.mxu0 0.0
    %254 = vmatprep.subr.mxu0 0.0
    %255 = vmatpush1.xpose.msra.mxu0 0.0
    %256 = vmatprep.subr.mxu0 0.0
    %257 = vmatpush1.xpose.msra.mxu0 0.0
    %258 = vmatprep.subr.mxu0 0.0
    %259 = vmatpush1.xpose.msra.mxu0 0.0
    %260 = vmatprep.subr.mxu0 0.0
    %261 = vmatpush1.xpose.msra.mxu0 0.0
    %262 = vmatprep.subr.mxu0 0.0
    %263 = vmatpush1.xpose.msra.mxu0 0.0
    %264 = vmatprep.subr.mxu0 0.0
    %265 = vmatpush1.xpose.msra.mxu0 0.0
    %266 = vmatprep.subr.mxu0 0.0
    %267 = vmatpush1.xpose.msra.mxu0 0.0
    %268 = vmatprep.subr.mxu0 0.0
    %269 = vmatpush1.xpose.msra.mxu0 0.0
    %270 = vmatprep.subr.mxu0 0.0
    %271 = vmatpush1.xpose.msra.mxu0 0.0
    %272 = vmatprep.subr.mxu0 0.0
    %273 = vmatpush1.xpose.msra.mxu0 0.0
    %274 = vmatprep.subr.mxu0 0.0
    %275 = vmatpush1.xpose.msra.mxu0 0.0
    %276 = vmatprep.subr.mxu0 0.0
    %277 = vmatpush1.xpose.msra.mxu0 0.0
    %278 = vmatprep.subr.mxu0 0.0
    %279 = vmatpush1.xpose.msra.mxu0 0.0
    %280 = vmatprep.mubr.f32.mxu0 %v214
    %281 = vmatmul.mubr.f32.gmra.mrb[0].mxu0 %v213
    %v282 = vpop.f32.mrb[0].mxu0
    %v283 = vadd.f32 0.0, %v282
    %v284 = vpop.f32.mrb[0].mxu0
    %285 = vdwg.mxu0
    %v287 = vsel %vm120, %v283, 0
    %v290 = vsel %vm124, %v42, 0
    %292 = vmatprep.subr.mxu0 0.0
    %293 = vmatpush1.msra.mxu0 %v290
    %294 = vmatprep.subr.mxu0 0.0
    %295 = vmatpush1.msra.mxu0 0.0
    %296 = vmatprep.subr.mxu0 0.0
    %297 = vmatpush1.msra.mxu0 0.0
    %298 = vmatprep.subr.mxu0 0.0
    %299 = vmatpush1.msra.mxu0 0.0
    %300 = vmatprep.subr.mxu0 0.0
    %301 = vmatpush1.msra.mxu0 0.0
    %302 = vmatprep.subr.mxu0 0.0
    %303 = vmatpush1.msra.mxu0 0.0
    %304 = vmatprep.subr.mxu0 0.0
    %305 = vmatpush1.msra.mxu0 0.0
    %306 = vmatprep.subr.mxu0 0.0
    %307 = vmatpush1.msra.mxu0 0.0
    %308 = vmatprep.subr.mxu0 0.0
    %309 = vmatpush1.msra.mxu0 0.0
    %310 = vmatprep.subr.mxu0 0.0
    %311 = vmatpush1.msra.mxu0 0.0
    %312 = vmatprep.subr.mxu0 0.0
    %313 = vmatpush1.msra.mxu0 0.0
    %314 = vmatprep.subr.mxu0 0.0
    %315 = vmatpush1.msra.mxu0 0.0
    %316 = vmatprep.subr.mxu0 0.0
    %317 = vmatpush1.msra.mxu0 0.0
    %318 = vmatprep.subr.mxu0 0.0
    %319 = vmatpush1.msra.mxu0 0.0
    %320 = vmatprep.subr.mxu0 0.0
    %321 = vmatpush1.msra.mxu0 0.0
    %322 = vmatprep.subr.mxu0 0.0
    %323 = vmatpush1.msra.mxu0 0.0
    %324 = vmatprep.subr.mxu0 0.0
    %325 = vmatpush1.msra.mxu0 0.0
    %326 = vmatprep.subr.mxu0 0.0
    %327 = vmatpush1.msra.mxu0 0.0
    %328 = vmatprep.subr.mxu0 0.0
    %329 = vmatpush1.msra.mxu0 0.0
    %330 = vmatprep.subr.mxu0 0.0
    %331 = vmatpush1.msra.mxu0 0.0
    %332 = vmatprep.subr.mxu0 0.0
    %333 = vmatpush1.msra.mxu0 0.0
    %334 = vmatprep.subr.mxu0 0.0
    %335 = vmatpush1.msra.mxu0 0.0
    %336 = vmatprep.subr.mxu0 0.0
    %337 = vmatpush1.msra.mxu0 0.0
    %338 = vmatprep.subr.mxu0 0.0
    %339 = vmatpush1.msra.mxu0 0.0
    %340 = vmatprep.subr.mxu0 0.0
    %341 = vmatpush1.msra.mxu0 0.0
    %342 = vmatprep.subr.mxu0 0.0
    %343 = vmatpush1.msra.mxu0 0.0
    %344 = vmatprep.subr.mxu0 0.0
    %345 = vmatpush1.msra.mxu0 0.0
    %346 = vmatprep.subr.mxu0 0.0
    %347 = vmatpush1.msra.mxu0 0.0
    %348 = vmatprep.subr.mxu0 0.0
    %349 = vmatpush1.msra.mxu0 0.0
    %350 = vmatprep.subr.mxu0 0.0
    %351 = vmatpush1.msra.mxu0 0.0
    %352 = vmatprep.subr.mxu0 0.0
    %353 = vmatpush1.msra.mxu0 0.0
    %354 = vmatprep.subr.mxu0 0.0
    %355 = vmatpush1.msra.mxu0 0.0
    %356 = vmatprep.mubr.f32.mxu0 0.0
    %357 = vmatmul.mubr.f32.gmra.mrb[0].mxu0 %v287
    %v358 = vpop.f32.mrb[0].mxu0
    %v359 = vadd.f32 0.0, %v358
    %v360 = vpop.f32.mrb[0].mxu0
    %361 = vdwg.mxu0
    %362 = vst.msk [vmem:[#allocation2] sm:$0xff] %vm44, %v359
    %s363 = scalar_lea.vmem %s1, 8
    %v364 = vld [vmem:[%s363] sm:$0xff]
    %v366 = vsel %vm44, %v33, 0
    %368 = vmatprep.subr.mxu0 0.0
    %369 = vmatpush1.msra.mxu0 %v34
    %370 = vmatprep.subr.mxu0 0.0
    %371 = vmatpush1.msra.mxu0 %v35
    %372 = vmatprep.subr.mxu0 0.0
    %373 = vmatpush1.msra.mxu0 %v36
    %374 = vmatprep.subr.mxu0 0.0
    %375 = vmatpush1.msra.mxu0 %v37
    %376 = vmatprep.subr.mxu0 0.0
    %377 = vmatpush1.msra.mxu0 %v38
    %378 = vmatprep.subr.mxu0 0.0
    %379 = vmatpush1.msra.mxu0 %v39
    %380 = vmatprep.subr.mxu0 0.0
    %381 = vmatpush1.msra.mxu0 %v40
    %382 = vmatprep.subr.mxu0 0.0
    %383 = vmatpush1.msra.mxu0 %v41
    %384 = vmatprep.subr.mxu0 0.0
    %385 = vmatpush1.msra.mxu0 0.0
    %386 = vmatprep.subr.mxu0 0.0
    %387 = vmatpush1.msra.mxu0 0.0
    %388 = vmatprep.subr.mxu0 0.0
    %389 = vmatpush1.msra.mxu0 0.0
    %390 = vmatprep.subr.mxu0 0.0
    %391 = vmatpush1.msra.mxu0 0.0
    %392 = vmatprep.subr.mxu0 0.0
    %393 = vmatpush1.msra.mxu0 0.0
    %394 = vmatprep.subr.mxu0 0.0
    %395 = vmatpush1.msra.mxu0 0.0
    %396 = vmatprep.subr.mxu0 0.0
    %397 = vmatpush1.msra.mxu0 0.0
    %398 = vmatprep.subr.mxu0 0.0
    %399 = vmatpush1.msra.mxu0 0.0
    %400 = vmatprep.subr.mxu0 0.0
    %401 = vmatpush1.msra.mxu0 0.0
    %402 = vmatprep.subr.mxu0 0.0
    %403 = vmatpush1.msra.mxu0 0.0
    %404 = vmatprep.subr.mxu0 0.0
    %405 = vmatpush1.msra.mxu0 0.0
    %406 = vmatprep.subr.mxu0 0.0
    %407 = vmatpush1.msra.mxu0 0.0
    %408 = vmatprep.subr.mxu0 0.0
    %409 = vmatpush1.msra.mxu0 0.0
    %410 = vmatprep.subr.mxu0 0.0
    %411 = vmatpush1.msra.mxu0 0.0
    %412 = vmatprep.subr.mxu0 0.0
    %413 = vmatpush1.msra.mxu0 0.0
    %414 = vmatprep.subr.mxu0 0.0
    %415 = vmatpush1.msra.mxu0 0.0
    %416 = vmatprep.subr.mxu0 0.0
    %417 = vmatpush1.msra.mxu0 0.0
    %418 = vmatprep.subr.mxu0 0.0
    %419 = vmatpush1.msra.mxu0 0.0
    %420 = vmatprep.subr.mxu0 0.0
    %421 = vmatpush1.msra.mxu0 0.0
    %422 = vmatprep.subr.mxu0 0.0
    %423 = vmatpush1.msra.mxu0 0.0
    %424 = vmatprep.subr.mxu0 0.0
    %425 = vmatpush1.msra.mxu0 0.0
    %426 = vmatprep.subr.mxu0 0.0
    %427 = vmatpush1.msra.mxu0 0.0
    %428 = vmatprep.subr.mxu0 0.0
    %429 = vmatpush1.msra.mxu0 0.0
    %430 = vmatprep.subr.mxu0 0.0
    %431 = vmatpush1.msra.mxu0 0.0
    %432 = vmatprep.mubr.f32.mxu0 0.0
    %433 = vmatmul.mubr.f32.gmra.mrb[0].mxu0 %v366
    %v434 = vpop.f32.mrb[0].mxu0
    %v435 = vadd.f32 0.0, %v434
    %v436 = vpop.f32.mrb[0].mxu0
    %437 = vdwg.mxu0
    %v439 = vcombine.high %v364, %v364
    %v441 = vsel %vm120, %v435, 0
    %v443 = vsel %vm124, %v364, 0
    %v445 = vsel %vm124, %v439, 0
    %447 = vmatprep.subr.mxu0 %v445
    %448 = vmatpush1.msra.mxu0 %v443
    %449 = vmatprep.subr.mxu0 0.0
    %450 = vmatpush1.msra.mxu0 0.0
    %451 = vmatprep.subr.mxu0 0.0
    %452 = vmatpush1.msra.mxu0 0.0
    %453 = vmatprep.subr.mxu0 0.0
    %454 = vmatpush1.msra.mxu0 0.0
    %455 = vmatprep.subr.mxu0 0.0
    %456 = vmatpush1.msra.mxu0 0.0
    %457 = vmatprep.subr.mxu0 0.0
    %458 = vmatpush1.msra.mxu0 0.0
    %459 = vmatprep.subr.mxu0 0.0
    %460 = vmatpush1.msra.mxu0 0.0
    %461 = vmatprep.subr.mxu0 0.0
    %462 = vmatpush1.msra.mxu0 0.0
    %463 = vmatprep.subr.mxu0 0.0
    %464 = vmatpush1.msra.mxu0 0.0
    %465 = vmatprep.subr.mxu0 0.0
    %466 = vmatpush1.msra.mxu0 0.0
    %467 = vmatprep.subr.mxu0 0.0
    %468 = vmatpush1.msra.mxu0 0.0
    %469 = vmatprep.subr.mxu0 0.0
    %470 = vmatpush1.msra.mxu0 0.0
    %471 = vmatprep.subr.mxu0 0.0
    %472 = vmatpush1.msra.mxu0 0.0
    %473 = vmatprep.subr.mxu0 0.0
    %474 = vmatpush1.msra.mxu0 0.0
    %475 = vmatprep.subr.mxu0 0.0
    %476 = vmatpush1.msra.mxu0 0.0
    %477 = vmatprep.subr.mxu0 0.0
    %478 = vmatpush1.msra.mxu0 0.0
    %479 = vmatprep.subr.mxu0 0.0
    %480 = vmatpush1.msra.mxu0 0.0
    %481 = vmatprep.subr.mxu0 0.0
    %482 = vmatpush1.msra.mxu0 0.0
    %483 = vmatprep.subr.mxu0 0.0
    %484 = vmatpush1.msra.mxu0 0.0
    %485 = vmatprep.subr.mxu0 0.0
    %486 = vmatpush1.msra.mxu0 0.0
    %487 = vmatprep.subr.mxu0 0.0
    %488 = vmatpush1.msra.mxu0 0.0
    %489 = vmatprep.subr.mxu0 0.0
    %490 = vmatpush1.msra.mxu0 0.0
    %491 = vmatprep.subr.mxu0 0.0
    %492 = vmatpush1.msra.mxu0 0.0
    %493 = vmatprep.subr.mxu0 0.0
    %494 = vmatpush1.msra.mxu0 0.0
    %495 = vmatprep.subr.mxu0 0.0
    %496 = vmatpush1.msra.mxu0 0.0
    %497 = vmatprep.subr.mxu0 0.0
    %498 = vmatpush1.msra.mxu0 0.0
    %499 = vmatprep.subr.mxu0 0.0
    %500 = vmatpush1.msra.mxu0 0.0
    %501 = vmatprep.subr.mxu0 0.0
    %502 = vmatpush1.msra.mxu0 0.0
    %503 = vmatprep.subr.mxu0 0.0
    %504 = vmatpush1.msra.mxu0 0.0
    %505 = vmatprep.subr.mxu0 0.0
    %506 = vmatpush1.msra.mxu0 0.0
    %507 = vmatprep.subr.mxu0 0.0
    %508 = vmatpush1.msra.mxu0 0.0
    %509 = vmatprep.subr.mxu0 0.0
    %510 = vmatpush1.msra.mxu0 0.0
    %511 = vmatprep.mubr.f32.mxu0 0.0
    %512 = vmatmul.mubr.f32.gmra.mrb[0].mxu0 %v441
    %v513 = vpop.f32.mrb[0].mxu0
    %v514 = vadd.f32 0.0, %v513
    %v515 = vpop.f32.mrb[0].mxu0
    %v516 = vadd.f32 0.0, %v515
    %517 = vdwg.mxu0
    %v518 = vmax.f32 %v514, %v516
    %519 = vmax.xlane.f32.xlu0 %v518
    %v520 = vpop.xlane.xlu0 %519
    %v521 = vsub.f32 %v514, %v520
    %v522 = vsub.f32 %v516, %v520
    %v523 = vmul.f32 %v521, 1.442695
    %v524 = vpow.pop %v523
    %v525 = vmul.f32 %v522, 1.442695
    %v526 = vpow.pop %v525
    %v527 = vadd.f32 %v524, %v526
    %528 = vadd.xlane.f32.xlu0 %v527
    %v529 = vpop.xlane.xlu0 %528
    %v530 = vrcp.pop %v529
    %v531 = vmul.f32 %v524, %v530
    %v532 = vmul.f32 %v526, %v530
    %534 = vmatprep.subr.mxu0 %v439
    %535 = vmatpush1.xpose.msra.mxu0 %v364
    %536 = vmatprep.subr.mxu0 0.0
    %537 = vmatpush1.xpose.msra.mxu0 0.0
    %538 = vmatprep.subr.mxu0 0.0
    %539 = vmatpush1.xpose.msra.mxu0 0.0
    %540 = vmatprep.subr.mxu0 0.0
    %541 = vmatpush1.xpose.msra.mxu0 0.0
    %542 = vmatprep.subr.mxu0 0.0
    %543 = vmatpush1.xpose.msra.mxu0 0.0
    %544 = vmatprep.subr.mxu0 0.0
    %545 = vmatpush1.xpose.msra.mxu0 0.0
    %546 = vmatprep.subr.mxu0 0.0
    %547 = vmatpush1.xpose.msra.mxu0 0.0
    %548 = vmatprep.subr.mxu0 0.0
    %549 = vmatpush1.xpose.msra.mxu0 0.0
    %550 = vmatprep.subr.mxu0 0.0
    %551 = vmatpush1.xpose.msra.mxu0 0.0
    %552 = vmatprep.subr.mxu0 0.0
    %553 = vmatpush1.xpose.msra.mxu0 0.0
    %554 = vmatprep.subr.mxu0 0.0
    %555 = vmatpush1.xpose.msra.mxu0 0.0
    %556 = vmatprep.subr.mxu0 0.0
    %557 = vmatpush1.xpose.msra.mxu0 0.0
    %558 = vmatprep.subr.mxu0 0.0
    %559 = vmatpush1.xpose.msra.mxu0 0.0
    %560 = vmatprep.subr.mxu0 0.0
    %561 = vmatpush1.xpose.msra.mxu0 0.0
    %562 = vmatprep.subr.mxu0 0.0
    %563 = vmatpush1.xpose.msra.mxu0 0.0
    %564 = vmatprep.subr.mxu0 0.0
    %565 = vmatpush1.xpose.msra.mxu0 0.0
    %566 = vmatprep.subr.mxu0 0.0
    %567 = vmatpush1.xpose.msra.mxu0 0.0
    %568 = vmatprep.subr.mxu0 0.0
    %569 = vmatpush1.xpose.msra.mxu0 0.0
    %570 = vmatprep.subr.mxu0 0.0
    %571 = vmatpush1.xpose.msra.mxu0 0.0
    %572 = vmatprep.subr.mxu0 0.0
    %573 = vmatpush1.xpose.msra.mxu0 0.0
    %574 = vmatprep.subr.mxu0 0.0
    %575 = vmatpush1.xpose.msra.mxu0 0.0
    %576 = vmatprep.subr.mxu0 0.0
    %577 = vmatpush1.xpose.msra.mxu0 0.0
    %578 = vmatprep.subr.mxu0 0.0
    %579 = vmatpush1.xpose.msra.mxu0 0.0
    %580 = vmatprep.subr.mxu0 0.0
    %581 = vmatpush1.xpose.msra.mxu0 0.0
    %582 = vmatprep.subr.mxu0 0.0
    %583 = vmatpush1.xpose.msra.mxu0 0.0
    %584 = vmatprep.subr.mxu0 0.0
    %585 = vmatpush1.xpose.msra.mxu0 0.0
    %586 = vmatprep.subr.mxu0 0.0
    %587 = vmatpush1.xpose.msra.mxu0 0.0
    %588 = vmatprep.subr.mxu0 0.0
    %589 = vmatpush1.xpose.msra.mxu0 0.0
    %590 = vmatprep.subr.mxu0 0.0
    %591 = vmatpush1.xpose.msra.mxu0 0.0
    %592 = vmatprep.subr.mxu0 0.0
    %593 = vmatpush1.xpose.msra.mxu0 0.0
    %594 = vmatprep.subr.mxu0 0.0
    %595 = vmatpush1.xpose.msra.mxu0 0.0
    %596 = vmatprep.subr.mxu0 0.0
    %597 = vmatpush1.xpose.msra.mxu0 0.0
    %598 = vmatprep.mubr.f32.mxu0 %v532
    %599 = vmatmul.mubr.f32.gmra.mrb[0].mxu0 %v531
    %v600 = vpop.f32.mrb[0].mxu0
    %v601 = vadd.f32 0.0, %v600
    %v602 = vpop.f32.mrb[0].mxu0
    %603 = vdwg.mxu0
    %v605 = vsel %vm120, %v601, 0
    %607 = vmatprep.subr.mxu0 0.0
    %608 = vmatpush1.msra.mxu0 %v290
    %609 = vmatprep.subr.mxu0 0.0
    %610 = vmatpush1.msra.mxu0 0.0
    %611 = vmatprep.subr.mxu0 0.0
    %612 = vmatpush1.msra.mxu0 0.0
    %613 = vmatprep.subr.mxu0 0.0
    %614 = vmatpush1.msra.mxu0 0.0
    %615 = vmatprep.subr.mxu0 0.0
    %616 = vmatpush1.msra.mxu0 0.0
    %617 = vmatprep.subr.mxu0 0.0
    %618 = vmatpush1.msra.mxu0 0.0
    %619 = vmatprep.subr.mxu0 0.0
    %620 = vmatpush1.msra.mxu0 0.0
    %621 = vmatprep.subr.mxu0 0.0
    %622 = vmatpush1.msra.mxu0 0.0
    %623 = vmatprep.subr.mxu0 0.0
    %624 = vmatpush1.msra.mxu0 0.0
    %625 = vmatprep.subr.mxu0 0.0
    %626 = vmatpush1.msra.mxu0 0.0
    %627 = vmatprep.subr.mxu0 0.0
    %628 = vmatpush1.msra.mxu0 0.0
    %629 = vmatprep.subr.mxu0 0.0
    %630 = vmatpush1.msra.mxu0 0.0
    %631 = vmatprep.subr.mxu0 0.0
    %632 = vmatpush1.msra.mxu0 0.0
    %633 = vmatprep.subr.mxu0 0.0
    %634 = vmatpush1.msra.mxu0 0.0
    %635 = vmatprep.subr.mxu0 0.0
    %636 = vmatpush1.msra.mxu0 0.0
    %637 = vmatprep.subr.mxu0 0.0
    %638 = vmatpush1.msra.mxu0 0.0
    %639 = vmatprep.subr.mxu0 0.0
    %640 = vmatpush1.msra.mxu0 0.0
    %641 = vmatprep.subr.mxu0 0.0
    %642 = vmatpush1.msra.mxu0 0.0
    %643 = vmatprep.subr.mxu0 0.0
    %644 = vmatpush1.msra.mxu0 0.0
    %645 = vmatprep.subr.mxu0 0.0
    %646 = vmatpush1.msra.mxu0 0.0
    %647 = vmatprep.subr.mxu0 0.0
    %648 = vmatpush1.msra.mxu0 0.0
    %649 = vmatprep.subr.mxu0 0.0
    %650 = vmatpush1.msra.mxu0 0.0
    %651 = vmatprep.subr.mxu0 0.0
    %652 = vmatpush1.msra.mxu0 0.0
    %653 = vmatprep.subr.mxu0 0.0
    %654 = vmatpush1.msra.mxu0 0.0
    %655 = vmatprep.subr.mxu0 0.0
    %656 = vmatpush1.msra.mxu0 0.0
    %657 = vmatprep.subr.mxu0 0.0
    %658 = vmatpush1.msra.mxu0 0.0
    %659 = vmatprep.subr.mxu0 0.0
    %660 = vmatpush1.msra.mxu0 0.0
    %661 = vmatprep.subr.mxu0 0.0
    %662 = vmatpush1.msra.mxu0 0.0
    %663 = vmatprep.subr.mxu0 0.0
    %664 = vmatpush1.msra.mxu0 0.0
    %665 = vmatprep.subr.mxu0 0.0
    %666 = vmatpush1.msra.mxu0 0.0
    %667 = vmatprep.subr.mxu0 0.0
    %668 = vmatpush1.msra.mxu0 0.0
    %669 = vmatprep.subr.mxu0 0.0
    %670 = vmatpush1.msra.mxu0 0.0
    %671 = vmatprep.mubr.f32.mxu0 0.0
    %672 = vmatmul.mubr.f32.gmra.mrb[0].mxu0 %v605
    %v673 = vpop.f32.mrb[0].mxu0
    %v674 = vadd.f32 0.0, %v673
    %v675 = vpop.f32.mrb[0].mxu0
    %676 = vdwg.mxu0
    %s677 = scalar_lea.vmem [#allocation2], 8
    %678 = vst.msk [vmem:[%s677] sm:$0xff] %vm44, %v674
    // Predicated region
    $region18: #{model_forward.1} parent=1 // pred_check
      _
    $region19: #{model_forward.1} parent=1 // pred_check_branch
      %680 = sbr.rel (0) target = $region21
    $region20: #{model_forward.1} parent=1 // pred_region
      %s682 = ssub.s32 256, 256
      %683 = vsyncadd [#allocation3], %s682
      %s684 = sshll.u32 [#allocation2], 4
      %s685 = int_to_ptr.vmem [resolvable:$true] %s684
      %690 = dma.vmem_to_hbm [thread:$0]  %s685, 256, %s4, [#allocation3], 128, 128, 8
    $region21: #{model_forward.1} parent=1 // pred_fallthru
      _
    // Predicated region
    $region22: #{model_forward.1} parent=1 // pred_check
      _
    $region23: #{model_forward.1} parent=1 // pred_check_branch
      %692 = sbr.rel (0) target = $region25
    $region24: #{model_forward.1} parent=1 // pred_region
      %693 = dma.done [#allocation3], 256
    $region25: #{model_forward.1} parent=1 // pred_fallthru
      _
    %694 = vsyncpa [#allocation3], 1

</llo_original>
